<compile_context>
chip_gen: v7x
topology: tpu7x:2x2x1
jax: 0.10.0
libtpu: 0.0.40
codegen_flags: <defaults>
</compile_context>

<pallas_src>
import functools

import jax
import jax.numpy as jnp
from jax.experimental import pallas as pl
from jax.experimental.pallas import tpu as pltpu


def _mlp_kernel(xT_ref, w0_ref, b0_ref, w1_ref, b1_ref, w2_ref, b2_ref, oT_ref,
                *, matmul_dtype):
    """One row-tile: out.T = W2 @ relu(W1 @ relu(W0 @ x.T + b0) + b1) + b2."""
    xT = xT_ref[...].astype(matmul_dtype)                       # (Din, tn)

    h0 = jnp.dot(w0_ref[...].astype(matmul_dtype), xT,
                 preferred_element_type=jnp.float32)            # (H, tn)
    h0 = jnp.maximum(h0 + b0_ref[...], 0.0)                     # (H,1) bcast on lanes

    h1 = jnp.dot(w1_ref[...].astype(matmul_dtype), h0.astype(matmul_dtype),
                 preferred_element_type=jnp.float32)            # (H, tn)
    h1 = jnp.maximum(h1 + b1_ref[...], 0.0)

    out = jnp.dot(w2_ref[...].astype(matmul_dtype), h1.astype(matmul_dtype),
                  preferred_element_type=jnp.float32)           # (Dout, tn)
    out = out + b2_ref[...]

    oT_ref[...] = out.astype(oT_ref.dtype)


def _pick_row_tile(n_rows, block_rows):
    """Row tile on the lane axis: multiple of 128, sized for pipelining."""
    if block_rows is not None:
        return max(128, pl.cdiv(block_rows, 128) * 128)  # round up to lane granule
    n128 = pl.cdiv(max(n_rows, 1), 128) * 128
    tn = min(512, n128)   # 512-row tiles sit in the ~85%-of-HBM-roofline regime
    # Prefer >=2 grid steps when rows allow (pipelining + v7x megacore sharding).
    if n128 // tn < 2 and n128 // 128 >= 2:
        tn = ((n128 // 128) // 2) * 128
    return tn


@functools.partial(jax.jit, static_argnames=("block_rows", "matmul_dtype"))
def particle_predictor_forward(x, params, block_rows=None, matmul_dtype=jnp.float32):
    """JAX/Pallas equivalent of ParticlePredictor.forward.

    x: (..., input_size)
    params (PyTorch nn.Linear layout, weight = (out_features, in_features)):
      w0 (H, Din), b0 (H,), w1 (H, H), b1 (H,), w2 (Dout, H), b2 (Dout,)
    """
    w0, b0 = params["w0"], params["b0"]
    w1, b1 = params["w1"], params["b1"]
    w2, b2 = params["w2"], params["b2"]

    in_size = x.shape[-1]
    hidden = w0.shape[0]
    out_size = w2.shape[0]
    lead_shape = x.shape[:-1]

    x2d = x.reshape(-1, in_size)                     # x.view(-1, s_x[-1])
    n_rows = x2d.shape[0]

    # Rows go on the 128-wide lane axis; pad the row count up to the tile size
    # (ragged batches handled by padding + slicing, no divisibility assert).
    tn = _pick_row_tile(n_rows, block_rows)
    n_pad = pl.cdiv(n_rows, tn) * tn
    if n_pad != n_rows:
        x2d = jnp.pad(x2d, ((0, n_pad - n_rows), (0, 0)))
    xT = x2d.T                                       # (Din, n_pad): lane-dense rows

    # Biases as (features, 1) columns so they broadcast along the lane axis.
    b0c = b0.reshape(hidden, 1)
    b1c = b1.reshape(hidden, 1)
    b2c = b2.reshape(out_size, 1)

    grid = (n_pad // tn,)

    # Weights / biases are grid-invariant: fetch once, single-buffered (default
    # double-buffering would waste VMEM -- matters most on v7x's 64 MiB VMEM).
    # TODO(synk): for hidden sizes >~1K, additionally tile the hidden dim as a
    # reduction grid axis with a VMEM accumulator instead of one (H,H) block.
    def const_spec(shape):
        return pl.BlockSpec(shape, lambda i: (0, 0), pipeline_mode=pl.Buffered(1))

    itemsize = jnp.dtype(x.dtype).itemsize
    flops = 2 * n_pad * (in_size * hidden + hidden * hidden + hidden * out_size)
    bytes_accessed = itemsize * (
        n_pad * (in_size + out_size)
        + w0.size + w1.size + w2.size + b0.size + b1.size + b2.size)

    outT = pl.pallas_call(
        functools.partial(_mlp_kernel, matmul_dtype=matmul_dtype),
        out_shape=jax.ShapeDtypeStruct((out_size, n_pad), x.dtype),
        grid_spec=pltpu.PrefetchScalarGridSpec(
            num_scalar_prefetch=0,
            grid=grid,
            in_specs=[
                pl.BlockSpec((in_size, tn), lambda i: (0, i)),   # x.T row tile
                const_spec((hidden, in_size)),                   # W0
                const_spec((hidden, 1)),                         # b0
                const_spec((hidden, hidden)),                    # W1
                const_spec((hidden, 1)),                         # b1
                const_spec((out_size, hidden)),                  # W2
                const_spec((out_size, 1)),                       # b2
            ],
            out_specs=pl.BlockSpec((out_size, tn), lambda i: (0, i)),
        ),
        compiler_params=pltpu.CompilerParams(
            dimension_semantics=("parallel",),       # row tiles are independent
            vmem_limit_bytes=32 * 1024 * 1024,       # generation-safe (v7x: 64 MiB)
        ),
        cost_estimate=pl.CostEstimate(
            flops=flops, transcendentals=0, bytes_accessed=bytes_accessed),
    )(xT, w0, b0c, w1, b1c, w2, b2c)

    out2d = outT.T[:n_rows]                          # back to (N, Dout), drop padding
    return out2d.reshape(lead_shape + (out_size,))   # .view(s_x[:-1] + [-1])


def init_params(key, input_size, hidden_size, output_size, dtype=jnp.float32):
    """nn.Linear-style init: W (out, in), b (out,), U(-1/sqrt(fan_in), +1/sqrt(fan_in))."""
    keys = jax.random.split(key, 6)

    def linear(kw, kb, fan_in, fan_out):
        bound = fan_in ** -0.5
        w = jax.random.uniform(kw, (fan_out, fan_in), dtype, -bound, bound)
        b = jax.random.uniform(kb, (fan_out,), dtype, -bound, bound)
        return w, b

    w0, b0 = linear(keys[0], keys[1], input_size, hidden_size)
    w1, b1 = linear(keys[2], keys[3], hidden_size, hidden_size)
    w2, b2 = linear(keys[4], keys[5], hidden_size, output_size)
    return {"w0": w0, "b0": b0, "w1": w1, "b1": b1, "w2": w2, "b2": b2}


def _reference_forward(x, params):
    """Pure-JAX reference mirroring the PyTorch module."""
    s_x = x.shape
    h = x.reshape(-1, s_x[-1])
    h = jnp.maximum(h @ params["w0"].T + params["b0"], 0.0)
    h = jnp.maximum(h @ params["w1"].T + params["b1"], 0.0)
    out = h @ params["w2"].T + params["b2"]
    return out.reshape(s_x[:-1] + (out.shape[-1],))


if __name__ == "__main__":
    key = jax.random.PRNGKey(0)
    k_params, k_x = jax.random.split(key)

    # Small shapes consistent with the module: (batch, n_particles, input_size).
    batch, n_particles = 2, 8
    input_size, hidden_size, output_size = 16, 32, 8

    params = init_params(k_params, input_size, hidden_size, output_size)
    x = jax.random.normal(k_x, (batch, n_particles, input_size), jnp.float32)

    ref = _reference_forward(x, params)

    # Default f32 path (tolerance allows for MXU default-precision matmuls).
    out = jax.block_until_ready(particle_predictor_forward(x, params))
    assert out.shape == (batch, n_particles, output_size), out.shape
    assert jnp.allclose(out, ref, atol=2e-3, rtol=2e-3), "f32 mismatch vs reference"

    # bf16 matmul inputs (MXU-native on v5e/v6e/v7x), f32 accumulation.
    out_bf16 = jax.block_until_ready(
        particle_predictor_forward(x, params, matmul_dtype=jnp.bfloat16))
    assert out_bf16.shape == out.shape
    assert jnp.allclose(out_bf16, ref, atol=1e-1, rtol=1e-1), "bf16 path diverged"

    # Ragged, larger row count: exercises cdiv padding and a multi-tile grid.
    x_big = jax.random.normal(k_x, (3, 123, input_size), jnp.float32)
    out_big = jax.block_until_ready(particle_predictor_forward(x_big, params))
    assert out_big.shape == (3, 123, output_size), out_big.shape
    assert jnp.allclose(out_big, _reference_forward(x_big, params),
                        atol=2e-3, rtol=2e-3), "padded-grid mismatch vs reference"

    print("KERNEL_OK")
</pallas_src>

<mosaic_0001>
module attributes {stable_mosaic.version = 11 : i64} {
  func.func @_mlp_kernel(%arg0: i32, %arg1: memref<16x128xf32, #tpu.memory_space<vmem>>, %arg2: memref<32x16xf32, #tpu.memory_space<vmem>>, %arg3: memref<32x1xf32, #tpu.memory_space<vmem>>, %arg4: memref<32x32xf32, #tpu.memory_space<vmem>>, %arg5: memref<32x1xf32, #tpu.memory_space<vmem>>, %arg6: memref<8x32xf32, #tpu.memory_space<vmem>>, %arg7: memref<8x1xf32, #tpu.memory_space<vmem>>, %arg8: memref<8x128xf32, #tpu.memory_space<vmem>>) attributes {dimension_semantics = [#tpu.dimension_semantics<parallel>], iteration_bounds = array<i64: 1>, scalar_prefetch = 0 : i64, scratch_operands = 0 : i64, tpu.core_type = #tpu.core_type<tc>, window_params = [{transform_indices = @transform_0, window_bounds = array<i64: 16, 128>}, {pipeline_mode = #tpu.pipeline_mode<synchronous>, transform_indices = @transform_1, window_bounds = array<i64: 32, 16>}, {pipeline_mode = #tpu.pipeline_mode<synchronous>, transform_indices = @transform_2, window_bounds = array<i64: 32, 1>}, {pipeline_mode = #tpu.pipeline_mode<synchronous>, transform_indices = @transform_3, window_bounds = array<i64: 32, 32>}, {pipeline_mode = #tpu.pipeline_mode<synchronous>, transform_indices = @transform_4, window_bounds = array<i64: 32, 1>}, {pipeline_mode = #tpu.pipeline_mode<synchronous>, transform_indices = @transform_5, window_bounds = array<i64: 8, 32>}, {pipeline_mode = #tpu.pipeline_mode<synchronous>, transform_indices = @transform_6, window_bounds = array<i64: 8, 1>}, {transform_indices = @transform_7, window_bounds = array<i64: 8, 128>}]} {
    %c0 = arith.constant 0 : index
    %c0_0 = arith.constant 0 : index
    %0 = vector.load %arg1[%c0, %c0_0] : memref<16x128xf32, #tpu.memory_space<vmem>>, vector<16x128xf32>
    %c0_1 = arith.constant 0 : index
    %c0_2 = arith.constant 0 : index
    %1 = vector.load %arg2[%c0_1, %c0_2] : memref<32x16xf32, #tpu.memory_space<vmem>>, vector<32x16xf32>
    %cst = arith.constant dense<0.000000e+00> : vector<32x128xf32>
    %2 = tpu.matmul %1, %0, %cst {dimension_numbers = #tpu.dot_dimension_numbers<[1], [0], [0], [1], [0, 0, 1, 1], [], []>} : vector<32x16xf32>, vector<16x128xf32>, vector<32x128xf32> -> vector<32x128xf32>
    %c0_3 = arith.constant 0 : index
    %c0_4 = arith.constant 0 : index
    %3 = vector.load %arg3[%c0_3, %c0_4] : memref<32x1xf32, #tpu.memory_space<vmem>>, vector<32x1xf32>
    %4 = vector.broadcast %3 : vector<32x1xf32> to vector<32x128xf32>
    %5 = arith.addf %2, %4 : vector<32x128xf32>
    %cst_5 = arith.constant 0.000000e+00 : f32
    %6 = vector.broadcast %cst_5 : f32 to vector<32x128xf32>
    %7 = arith.maximumf %5, %6 : vector<32x128xf32>
    %c0_6 = arith.constant 0 : index
    %c0_7 = arith.constant 0 : index
    %8 = vector.load %arg4[%c0_6, %c0_7] : memref<32x32xf32, #tpu.memory_space<vmem>>, vector<32x32xf32>
    %cst_8 = arith.constant dense<0.000000e+00> : vector<32x128xf32>
    %9 = tpu.matmul %8, %7, %cst_8 {dimension_numbers = #tpu.dot_dimension_numbers<[1], [0], [0], [1], [0, 0, 1, 1], [], []>} : vector<32x32xf32>, vector<32x128xf32>, vector<32x128xf32> -> vector<32x128xf32>
    %c0_9 = arith.constant 0 : index
    %c0_10 = arith.constant 0 : index
    %10 = vector.load %arg5[%c0_9, %c0_10] : memref<32x1xf32, #tpu.memory_space<vmem>>, vector<32x1xf32>
    %11 = vector.broadcast %10 : vector<32x1xf32> to vector<32x128xf32>
    %12 = arith.addf %9, %11 : vector<32x128xf32>
    %cst_11 = arith.constant 0.000000e+00 : f32
    %13 = vector.broadcast %cst_11 : f32 to vector<32x128xf32>
    %14 = arith.maximumf %12, %13 : vector<32x128xf32>
    %c0_12 = arith.constant 0 : index
    %c0_13 = arith.constant 0 : index
    %15 = vector.load %arg6[%c0_12, %c0_13] : memref<8x32xf32, #tpu.memory_space<vmem>>, vector<8x32xf32>
    %cst_14 = arith.constant dense<0.000000e+00> : vector<8x128xf32>
    %16 = tpu.matmul %15, %14, %cst_14 {dimension_numbers = #tpu.dot_dimension_numbers<[1], [0], [0], [1], [0, 0, 1, 1], [], []>} : vector<8x32xf32>, vector<32x128xf32>, vector<8x128xf32> -> vector<8x128xf32>
    %c0_15 = arith.constant 0 : index
    %c0_16 = arith.constant 0 : index
    %17 = vector.load %arg7[%c0_15, %c0_16] : memref<8x1xf32, #tpu.memory_space<vmem>>, vector<8x1xf32>
    %18 = vector.broadcast %17 : vector<8x1xf32> to vector<8x128xf32>
    %19 = arith.addf %16, %18 : vector<8x128xf32>
    %c0_17 = arith.constant 0 : index
    %c0_18 = arith.constant 0 : index
    %20 = vector.load %arg8[%c0_17, %c0_18] : memref<8x128xf32, #tpu.memory_space<vmem>>, vector<8x128xf32>
    tpu.vector_store %arg8[%c0_17, %c0_18], %19 {strides = array<i32>} : memref<8x128xf32, #tpu.memory_space<vmem>>, vector<8x128xf32>,
    return
  }
  func.func @transform_0(%arg0: i32) -> (i32, i32) {
    %c0_i32 = arith.constant 0 : i32
    %c0_i32_0 = arith.constant 0 : i32
    return %c0_i32, %arg0 : i32, i32
  }
  func.func @transform_1(%arg0: i32) -> (i32, i32) {
    %c0_i32 = arith.constant 0 : i32
    %c0_i32_0 = arith.constant 0 : i32
    %c0_i32_1 = arith.constant 0 : i32
    return %c0_i32, %c0_i32_0 : i32, i32
  }
  func.func @transform_2(%arg0: i32) -> (i32, i32) {
    %c0_i32 = arith.constant 0 : i32
    %c0_i32_0 = arith.constant 0 : i32
    %c0_i32_1 = arith.constant 0 : i32
    return %c0_i32, %c0_i32_0 : i32, i32
  }
  func.func @transform_3(%arg0: i32) -> (i32, i32) {
    %c0_i32 = arith.constant 0 : i32
    %c0_i32_0 = arith.constant 0 : i32
    %c0_i32_1 = arith.constant 0 : i32
    return %c0_i32, %c0_i32_0 : i32, i32
  }
  func.func @transform_4(%arg0: i32) -> (i32, i32) {
    %c0_i32 = arith.constant 0 : i32
    %c0_i32_0 = arith.constant 0 : i32
    %c0_i32_1 = arith.constant 0 : i32
    return %c0_i32, %c0_i32_0 : i32, i32
  }
  func.func @transform_5(%arg0: i32) -> (i32, i32) {
    %c0_i32 = arith.constant 0 : i32
    %c0_i32_0 = arith.constant 0 : i32
    %c0_i32_1 = arith.constant 0 : i32
    return %c0_i32, %c0_i32_0 : i32, i32
  }
  func.func @transform_6(%arg0: i32) -> (i32, i32) {
    %c0_i32 = arith.constant 0 : i32
    %c0_i32_0 = arith.constant 0 : i32
    %c0_i32_1 = arith.constant 0 : i32
    return %c0_i32, %c0_i32_0 : i32, i32
  }
  func.func @transform_7(%arg0: i32) -> (i32, i32) {
    %c0_i32 = arith.constant 0 : i32
    %c0_i32_0 = arith.constant 0 : i32
    return %c0_i32, %arg0 : i32, i32
  }
}

</mosaic_0001>

<llo_original>
// kernel: particle_predictor_forward.1
$region0: #{particle_predictor_forward.1}
  #allocation0 [shape = 'u32[]', space=smem, size = 0x4, offset = 0x4, fixed_abs, tag = 'smem constant byte address 0x4 - core index']
  #allocation1 [shape = 'u32[144,128]{1,0:T(1,128)}', space=vmem, size = 0x12000, scoped, tag = 'internal scratch']
  %s0 = inlined_call_operand.vmem [shape: f32[16,128], index: 0, kind: input, shape index: {}]
  %s1 = inlined_call_operand.vmem [shape: f32[32,16], index: 1, kind: input, shape index: {}]
  %s2 = inlined_call_operand.vmem [shape: f32[32,1], index: 2, kind: input, shape index: {}]
  %s3 = inlined_call_operand.vmem [shape: f32[32,32], index: 3, kind: input, shape index: {}]
  %s4 = inlined_call_operand.vmem [shape: f32[32,1], index: 4, kind: input, shape index: {}]
  %s5 = inlined_call_operand.vmem [shape: f32[8,32], index: 5, kind: input, shape index: {}]
  %s6 = inlined_call_operand.vmem [shape: f32[8,1], index: 6, kind: input, shape index: {}]
  %s7 = inlined_call_operand.vmem [shape: f32[8,128], index: 7, kind: output, shape index: {}]
  %s8 = sld [smem:[#allocation0]]
  $region38: #{particle_predictor_forward.1} parent=0
    _
  %s10 = ssub.s32 1, %s8
  %s11 = scalar_select 0, %s10, %s8
  // Predicated region
  $region2: #{particle_predictor_forward.1} parent=0 // pred_check
    _
  $region3: #{particle_predictor_forward.1} parent=0 // pred_check_branch
    %13 = sbr.rel (0) target = $region5
  $region4: #{particle_predictor_forward.1} parent=0 // pred_region
    _
  $region5: #{particle_predictor_forward.1} parent=0 // pred_fallthru
    _
  // Predicated region
  $region6: #{particle_predictor_forward.1} parent=0 // pred_check
    _
  $region7: #{particle_predictor_forward.1} parent=0 // pred_check_branch
    %15 = sbr.rel (0) target = $region9
  $region8: #{particle_predictor_forward.1} parent=0 // pred_region
    _
  $region9: #{particle_predictor_forward.1} parent=0 // pred_fallthru
    _
  // Predicated region
  $region10: #{particle_predictor_forward.1} parent=0 // pred_check
    _
  $region11: #{particle_predictor_forward.1} parent=0 // pred_check_branch
    %17 = sbr.rel (0) target = $region13
  $region12: #{particle_predictor_forward.1} parent=0 // pred_region
    _
  $region13: #{particle_predictor_forward.1} parent=0 // pred_fallthru
    _
  // Predicated region
  $region14: #{particle_predictor_forward.1} parent=0 // pred_check
    _
  $region15: #{particle_predictor_forward.1} parent=0 // pred_check_branch
    %19 = sbr.rel (0) target = $region17
  $region16: #{particle_predictor_forward.1} parent=0 // pred_region
    _
  $region17: #{particle_predictor_forward.1} parent=0 // pred_fallthru
    _
  // Predicated region
  $region18: #{particle_predictor_forward.1} parent=0 // pred_check
    _
  $region19: #{particle_predictor_forward.1} parent=0 // pred_check_branch
    %21 = sbr.rel (0) target = $region21
  $region20: #{particle_predictor_forward.1} parent=0 // pred_region
    _
  $region21: #{particle_predictor_forward.1} parent=0 // pred_fallthru
    _
  // Predicated region
  $region22: #{particle_predictor_forward.1} parent=0 // pred_check
    _
  $region23: #{particle_predictor_forward.1} parent=0 // pred_check_branch
    %23 = sbr.rel (0) target = $region25
  $region24: #{particle_predictor_forward.1} parent=0 // pred_region
    _
  $region25: #{particle_predictor_forward.1} parent=0 // pred_fallthru
    _
  // Predicated region
  $region26: #{particle_predictor_forward.1} parent=0 // pred_check
    _
  $region27: #{particle_predictor_forward.1} parent=0 // pred_check_branch
    %25 = sbr.rel (0) target = $region29
  $region28: #{particle_predictor_forward.1} parent=0 // pred_region
    _
  $region29: #{particle_predictor_forward.1} parent=0 // pred_fallthru
    _
  %v26 = vld [vmem:[%s0] sm:$0xff]
  %v27 = vld [vmem:[%s0 + $0x8] sm:$0xff]
  %v28 = vld [vmem:[%s1] sm:$0xff]
  %v29 = vld [vmem:[%s1 + $0x8] sm:$0xff]
  %v30 = vld [vmem:[%s1 + $0x10] sm:$0xff]
  %v31 = vld [vmem:[%s1 + $0x18] sm:$0xff]
  %v32 = vld [vmem:[%s2] sm:$0xff]
  %v33 = vld [vmem:[%s2 + $0x8] sm:$0xff]
  %v34 = vld [vmem:[%s2 + $0x10] sm:$0xff]
  %v35 = vld [vmem:[%s2 + $0x18] sm:$0xff]
  %37 = vset.pattern.permute.xlu0 0
  %38 = vperm.xlu0 %37, %v32
  %v39 = vpop.permute.xlu0 %38
  %42 = vset.pattern.permute.xlu0 0
  %43 = vperm.xlu0 %42, %v33
  %v44 = vpop.permute.xlu0 %43
  %47 = vset.pattern.permute.xlu0 0
  %48 = vperm.xlu0 %47, %v34
  %v49 = vpop.permute.xlu0 %48
  %52 = vset.pattern.permute.xlu0 0
  %53 = vperm.xlu0 %52, %v35
  %v54 = vpop.permute.xlu0 %53
  %vm56 = vcmask 130048
  %v58 = vsel %vm56, %v28, 0
  %v61 = vsel %vm56, %v29, 0
  %v64 = vsel %vm56, %v30, 0
  %v67 = vsel %vm56, %v31, 0
  %69 = vmatprep.subr.mxu0 0.0
  %70 = vmatpush1.msra.mxu0 %v26
  %71 = vmatprep.subr.mxu0 0.0
  %72 = vmatpush1.msra.mxu0 %v27
  %73 = vmatprep.subr.mxu0 0.0
  %74 = vmatpush1.msra.mxu0 0.0
  %75 = vmatprep.subr.mxu0 0.0
  %76 = vmatpush1.msra.mxu0 0.0
  %77 = vmatprep.subr.mxu0 0.0
  %78 = vmatpush1.msra.mxu0 0.0
  %79 = vmatprep.subr.mxu0 0.0
  %80 = vmatpush1.msra.mxu0 0.0
  %81 = vmatprep.subr.mxu0 0.0
  %82 = vmatpush1.msra.mxu0 0.0
  %83 = vmatprep.subr.mxu0 0.0
  %84 = vmatpush1.msra.mxu0 0.0
  %85 = vmatprep.subr.mxu0 0.0
  %86 = vmatpush1.msra.mxu0 0.0
  %87 = vmatprep.subr.mxu0 0.0
  %88 = vmatpush1.msra.mxu0 0.0
  %89 = vmatprep.subr.mxu0 0.0
  %90 = vmatpush1.msra.mxu0 0.0
  %91 = vmatprep.subr.mxu0 0.0
  %92 = vmatpush1.msra.mxu0 0.0
  %93 = vmatprep.subr.mxu0 0.0
  %94 = vmatpush1.msra.mxu0 0.0
  %95 = vmatprep.subr.mxu0 0.0
  %96 = vmatpush1.msra.mxu0 0.0
  %97 = vmatprep.subr.mxu0 0.0
  %98 = vmatpush1.msra.mxu0 0.0
  %99 = vmatprep.subr.mxu0 0.0
  %100 = vmatpush1.msra.mxu0 0.0
  %101 = vmatprep.subr.mxu0 0.0
  %102 = vmatpush1.msra.mxu0 0.0
  %103 = vmatprep.subr.mxu0 0.0
  %104 = vmatpush1.msra.mxu0 0.0
  %105 = vmatprep.subr.mxu0 0.0
  %106 = vmatpush1.msra.mxu0 0.0
  %107 = vmatprep.subr.mxu0 0.0
  %108 = vmatpush1.msra.mxu0 0.0
  %109 = vmatprep.subr.mxu0 0.0
  %110 = vmatpush1.msra.mxu0 0.0
  %111 = vmatprep.subr.mxu0 0.0
  %112 = vmatpush1.msra.mxu0 0.0
  %113 = vmatprep.subr.mxu0 0.0
  %114 = vmatpush1.msra.mxu0 0.0
  %115 = vmatprep.subr.mxu0 0.0
  %116 = vmatpush1.msra.mxu0 0.0
  %117 = vmatprep.subr.mxu0 0.0
  %118 = vmatpush1.msra.mxu0 0.0
  %119 = vmatprep.subr.mxu0 0.0
  %120 = vmatpush1.msra.mxu0 0.0
  %121 = vmatprep.subr.mxu0 0.0
  %122 = vmatpush1.msra.mxu0 0.0
  %123 = vmatprep.subr.mxu0 0.0
  %124 = vmatpush1.msra.mxu0 0.0
  %125 = vmatprep.subr.mxu0 0.0
  %126 = vmatpush1.msra.mxu0 0.0
  %127 = vmatprep.subr.mxu0 0.0
  %128 = vmatpush1.msra.mxu0 0.0
  %129 = vmatprep.subr.mxu0 0.0
  %130 = vmatpush1.msra.mxu0 0.0
  %131 = vmatprep.subr.mxu0 0.0
  %132 = vmatpush1.msra.mxu0 0.0
  %133 = vmatprep.mubr.f32.mxu0 0.0
  %134 = vmatmul.mubr.f32.gmra.mrb[0].mxu0 %v58
  %v135 = vpop.f32.mrb[0].mxu0
  %v136 = vadd.f32 %v39, %v135
  %v137 = vpop.f32.mrb[0].mxu0
  %138 = vmatprep.mubr.f32.mxu0 0.0
  %139 = vmatmul.mubr.f32.gmra.mrb[0].mxu0 %v61
  %v140 = vpop.f32.mrb[0].mxu0
  %v141 = vadd.f32 %v44, %v140
  %v142 = vpop.f32.mrb[0].mxu0
  %143 = vmatprep.mubr.f32.mxu0 0.0
  %144 = vmatmul.mubr.f32.gmra.mrb[0].mxu0 %v64
  %v145 = vpop.f32.mrb[0].mxu0
  %v146 = vadd.f32 %v49, %v145
  %v147 = vpop.f32.mrb[0].mxu0
  %148 = vmatprep.mubr.f32.mxu0 0.0
  %149 = vmatmul.mubr.f32.gmra.mrb[0].mxu0 %v67
  %v150 = vpop.f32.mrb[0].mxu0
  %v151 = vadd.f32 %v54, %v150
  %v152 = vpop.f32.mrb[0].mxu0
  %153 = vdwg.mxu0
  %v154 = vmax.f32 %v136, 0.0
  %v155 = vmax.f32 %v141, 0.0
  %v156 = vmax.f32 %v146, 0.0
  %v157 = vmax.f32 %v151, 0.0
  %v158 = vld [vmem:[%s3] sm:$0xff]
  %v159 = vld [vmem:[%s3 + $0x8] sm:$0xff]
  %v160 = vld [vmem:[%s3 + $0x10] sm:$0xff]
  %v161 = vld [vmem:[%s3 + $0x18] sm:$0xff]
  %v162 = vld [vmem:[%s4] sm:$0xff]
  %v163 = vld [vmem:[%s4 + $0x8] sm:$0xff]
  %v164 = vld [vmem:[%s4 + $0x10] sm:$0xff]
  %v165 = vld [vmem:[%s4 + $0x18] sm:$0xff]
  %167 = vset.pattern.permute.xlu0 0
  %168 = vperm.xlu0 %167, %v162
  %v169 = vpop.permute.xlu0 %168
  %172 = vset.pattern.permute.xlu0 0
  %173 = vperm.xlu0 %172, %v163
  %v174 = vpop.permute.xlu0 %173
  %177 = vset.pattern.permute.xlu0 0
  %178 = vperm.xlu0 %177, %v164
  %v179 = vpop.permute.xlu0 %178
  %182 = vset.pattern.permute.xlu0 0
  %183 = vperm.xlu0 %182, %v165
  %v184 = vpop.permute.xlu0 %183
  %vm186 = vcmask 261120
  %v188 = vsel %vm186, %v158, 0
  %v191 = vsel %vm186, %v159, 0
  %v194 = vsel %vm186, %v160, 0
  %v197 = vsel %vm186, %v161, 0
  %199 = vmatprep.subr.mxu0 0.0
  %200 = vmatpush1.msra.mxu0 %v154
  %201 = vmatprep.subr.mxu0 0.0
  %202 = vmatpush1.msra.mxu0 %v155
  %203 = vmatprep.subr.mxu0 0.0
  %204 = vmatpush1.msra.mxu0 %v156
  %205 = vmatprep.subr.mxu0 0.0
  %206 = vmatpush1.msra.mxu0 %v157
  %207 = vmatprep.subr.mxu0 0.0
  %208 = vmatpush1.msra.mxu0 0.0
  %209 = vmatprep.subr.mxu0 0.0
  %210 = vmatpush1.msra.mxu0 0.0
  %211 = vmatprep.subr.mxu0 0.0
  %212 = vmatpush1.msra.mxu0 0.0
  %213 = vmatprep.subr.mxu0 0.0
  %214 = vmatpush1.msra.mxu0 0.0
  %215 = vmatprep.subr.mxu0 0.0
  %216 = vmatpush1.msra.mxu0 0.0
  %217 = vmatprep.subr.mxu0 0.0
  %218 = vmatpush1.msra.mxu0 0.0
  %219 = vmatprep.subr.mxu0 0.0
  %220 = vmatpush1.msra.mxu0 0.0
  %221 = vmatprep.subr.mxu0 0.0
  %222 = vmatpush1.msra.mxu0 0.0
  %223 = vmatprep.subr.mxu0 0.0
  %224 = vmatpush1.msra.mxu0 0.0
  %225 = vmatprep.subr.mxu0 0.0
  %226 = vmatpush1.msra.mxu0 0.0
  %227 = vmatprep.subr.mxu0 0.0
  %228 = vmatpush1.msra.mxu0 0.0
  %229 = vmatprep.subr.mxu0 0.0
  %230 = vmatpush1.msra.mxu0 0.0
  %231 = vmatprep.subr.mxu0 0.0
  %232 = vmatpush1.msra.mxu0 0.0
  %233 = vmatprep.subr.mxu0 0.0
  %234 = vmatpush1.msra.mxu0 0.0
  %235 = vmatprep.subr.mxu0 0.0
  %236 = vmatpush1.msra.mxu0 0.0
  %237 = vmatprep.subr.mxu0 0.0
  %238 = vmatpush1.msra.mxu0 0.0
  %239 = vmatprep.subr.mxu0 0.0
  %240 = vmatpush1.msra.mxu0 0.0
  %241 = vmatprep.subr.mxu0 0.0
  %242 = vmatpush1.msra.mxu0 0.0
  %243 = vmatprep.subr.mxu0 0.0
  %244 = vmatpush1.msra.mxu0 0.0
  %245 = vmatprep.subr.mxu0 0.0
  %246 = vmatpush1.msra.mxu0 0.0
  %247 = vmatprep.subr.mxu0 0.0
  %248 = vmatpush1.msra.mxu0 0.0
  %249 = vmatprep.subr.mxu0 0.0
  %250 = vmatpush1.msra.mxu0 0.0
  %251 = vmatprep.subr.mxu0 0.0
  %252 = vmatpush1.msra.mxu0 0.0
  %253 = vmatprep.subr.mxu0 0.0
  %254 = vmatpush1.msra.mxu0 0.0
  %255 = vmatprep.subr.mxu0 0.0
  %256 = vmatpush1.msra.mxu0 0.0
  %257 = vmatprep.subr.mxu0 0.0
  %258 = vmatpush1.msra.mxu0 0.0
  %259 = vmatprep.subr.mxu0 0.0
  %260 = vmatpush1.msra.mxu0 0.0
  %261 = vmatprep.subr.mxu0 0.0
  %262 = vmatpush1.msra.mxu0 0.0
  %263 = vmatprep.mubr.f32.mxu0 0.0
  %264 = vmatmul.mubr.f32.gmra.mrb[0].mxu0 %v188
  %v265 = vpop.f32.mrb[0].mxu0
  %v266 = vadd.f32 %v169, %v265
  %v267 = vpop.f32.mrb[0].mxu0
  %268 = vmatprep.mubr.f32.mxu0 0.0
  %269 = vmatmul.mubr.f32.gmra.mrb[0].mxu0 %v191
  %v270 = vpop.f32.mrb[0].mxu0
  %v271 = vadd.f32 %v174, %v270
  %v272 = vpop.f32.mrb[0].mxu0
  %273 = vmatprep.mubr.f32.mxu0 0.0
  %274 = vmatmul.mubr.f32.gmra.mrb[0].mxu0 %v194
  %v275 = vpop.f32.mrb[0].mxu0
  %v276 = vadd.f32 %v179, %v275
  %v277 = vpop.f32.mrb[0].mxu0
  %278 = vmatprep.mubr.f32.mxu0 0.0
  %279 = vmatmul.mubr.f32.gmra.mrb[0].mxu0 %v197
  %v280 = vpop.f32.mrb[0].mxu0
  %v281 = vadd.f32 %v184, %v280
  %v282 = vpop.f32.mrb[0].mxu0
  %283 = vdwg.mxu0
  %v284 = vmax.f32 %v266, 0.0
  %v285 = vmax.f32 %v271, 0.0
  %v286 = vmax.f32 %v276, 0.0
  %v287 = vmax.f32 %v281, 0.0
  %v288 = vld [vmem:[%s5] sm:$0xff]
  %v289 = vld [vmem:[%s6] sm:$0xff]
  %291 = vset.pattern.permute.xlu0 0
  %292 = vperm.xlu0 %291, %v289
  %v293 = vpop.permute.xlu0 %292
  %v296 = vsel %vm186, %v288, 0
  %298 = vmatprep.subr.mxu0 0.0
  %299 = vmatpush1.msra.mxu0 %v284
  %300 = vmatprep.subr.mxu0 0.0
  %301 = vmatpush1.msra.mxu0 %v285
  %302 = vmatprep.subr.mxu0 0.0
  %303 = vmatpush1.msra.mxu0 %v286
  %304 = vmatprep.subr.mxu0 0.0
  %305 = vmatpush1.msra.mxu0 %v287
  %306 = vmatprep.subr.mxu0 0.0
  %307 = vmatpush1.msra.mxu0 0.0
  %308 = vmatprep.subr.mxu0 0.0
  %309 = vmatpush1.msra.mxu0 0.0
  %310 = vmatprep.subr.mxu0 0.0
  %311 = vmatpush1.msra.mxu0 0.0
  %312 = vmatprep.subr.mxu0 0.0
  %313 = vmatpush1.msra.mxu0 0.0
  %314 = vmatprep.subr.mxu0 0.0
  %315 = vmatpush1.msra.mxu0 0.0
  %316 = vmatprep.subr.mxu0 0.0
  %317 = vmatpush1.msra.mxu0 0.0
  %318 = vmatprep.subr.mxu0 0.0
  %319 = vmatpush1.msra.mxu0 0.0
  %320 = vmatprep.subr.mxu0 0.0
  %321 = vmatpush1.msra.mxu0 0.0
  %322 = vmatprep.subr.mxu0 0.0
  %323 = vmatpush1.msra.mxu0 0.0
  %324 = vmatprep.subr.mxu0 0.0
  %325 = vmatpush1.msra.mxu0 0.0
  %326 = vmatprep.subr.mxu0 0.0
  %327 = vmatpush1.msra.mxu0 0.0
  %328 = vmatprep.subr.mxu0 0.0
  %329 = vmatpush1.msra.mxu0 0.0
  %330 = vmatprep.subr.mxu0 0.0
  %331 = vmatpush1.msra.mxu0 0.0
  %332 = vmatprep.subr.mxu0 0.0
  %333 = vmatpush1.msra.mxu0 0.0
  %334 = vmatprep.subr.mxu0 0.0
  %335 = vmatpush1.msra.mxu0 0.0
  %336 = vmatprep.subr.mxu0 0.0
  %337 = vmatpush1.msra.mxu0 0.0
  %338 = vmatprep.subr.mxu0 0.0
  %339 = vmatpush1.msra.mxu0 0.0
  %340 = vmatprep.subr.mxu0 0.0
  %341 = vmatpush1.msra.mxu0 0.0
  %342 = vmatprep.subr.mxu0 0.0
  %343 = vmatpush1.msra.mxu0 0.0
  %344 = vmatprep.subr.mxu0 0.0
  %345 = vmatpush1.msra.mxu0 0.0
  %346 = vmatprep.subr.mxu0 0.0
  %347 = vmatpush1.msra.mxu0 0.0
  %348 = vmatprep.subr.mxu0 0.0
  %349 = vmatpush1.msra.mxu0 0.0
  %350 = vmatprep.subr.mxu0 0.0
  %351 = vmatpush1.msra.mxu0 0.0
  %352 = vmatprep.subr.mxu0 0.0
  %353 = vmatpush1.msra.mxu0 0.0
  %354 = vmatprep.subr.mxu0 0.0
  %355 = vmatpush1.msra.mxu0 0.0
  %356 = vmatprep.subr.mxu0 0.0
  %357 = vmatpush1.msra.mxu0 0.0
  %358 = vmatprep.subr.mxu0 0.0
  %359 = vmatpush1.msra.mxu0 0.0
  %360 = vmatprep.subr.mxu0 0.0
  %361 = vmatpush1.msra.mxu0 0.0
  %362 = vmatprep.mubr.f32.mxu0 0.0
  %363 = vmatmul.mubr.f32.gmra.mrb[0].mxu0 %v296
  %v364 = vpop.f32.mrb[0].mxu0
  %v365 = vadd.f32 %v293, %v364
  %v366 = vpop.f32.mrb[0].mxu0
  %367 = vdwg.mxu0
  %368 = vst [vmem:[%s7] sm:$0xff] %v365
  // Predicated region
  $region30: #{particle_predictor_forward.1} parent=0 // pred_check
    _
  $region31: #{particle_predictor_forward.1} parent=0 // pred_check_branch
    %370 = sbr.rel (0) target = $region33
  $region32: #{particle_predictor_forward.1} parent=0 // pred_region
    _
  $region33: #{particle_predictor_forward.1} parent=0 // pred_fallthru
    _
  // Predicated region
  $region34: #{particle_predictor_forward.1} parent=0 // pred_check
    _
  $region35: #{particle_predictor_forward.1} parent=0 // pred_check_branch
    %372 = sbr.rel (0) target = $region37
  $region36: #{particle_predictor_forward.1} parent=0 // pred_region
    _
  $region37: #{particle_predictor_forward.1} parent=0 // pred_fallthru
    _

</llo_original>
